<compile_context>
chip_gen: v6e
topology: v6e:2x2x1
jax: 0.10.0
libtpu: 0.0.40
codegen_flags: <defaults>
</compile_context>

<pallas_src>
import functools

import jax
import jax.numpy as jnp
from jax.experimental import pallas as pl
from jax.experimental.pallas import tpu as pltpu

_LANES = 128
_SUBLANES = 8
_MAX_BLOCK_ROWS = 4096     # (4096, 128) f32 = 2 MiB per input per buffer
_MIN_PALLAS_ELEMS = 1024   # below this, a pallas_call costs more than the math


# ----------------------------------------------------------------------------
# Elementwise transforms (shared by the Pallas kernels and the JAX tail path)
# ----------------------------------------------------------------------------
def _sq_diff_elem(x, y):
    d = x - y
    return d * d


def _bce_elem(p, t):
    # torch.nn.BCELoss clamps each log at -100.
    log_p = jnp.maximum(jnp.log(p), -100.0)
    log_1mp = jnp.maximum(jnp.log(1.0 - p), -100.0)
    return -(t * log_p + (1.0 - t) * log_1mp)


def _bce_hard_elem(p, t):
    # Valid only for hard {0,1} targets: one log per element instead of two.
    return -jnp.maximum(jnp.log(jnp.where(t > 0.5, p, 1.0 - p)), -100.0)


# ----------------------------------------------------------------------------
# Pallas kernel: sum of elem_fn(x, y) over a (rows, 128) array
# ----------------------------------------------------------------------------
def _reduce_sum_kernel(x_ref, y_ref, o_ref, *, elem_fn, block_rows,
                       valid_rows_last):
    i = pl.program_id(0)
    last = pl.num_programs(0) - 1

    @pl.when(i == 0)
    def _init():
        o_ref[...] = jnp.zeros_like(o_ref)

    x = x_ref[...].astype(jnp.float32)
    y = y_ref[...].astype(jnp.float32)
    contrib = elem_fn(x, y)                          # (block_rows, 128) f32

    def fold(c):
        # Free relabel (block_rows, 128) -> (tiles, 8, 128): each leading
        # index is exactly one vreg, so the axis-0 reduction is plain VPU
        # adds and the accumulator stays a single (8, 128) tile.
        tiles = block_rows // _SUBLANES
        return jnp.sum(c.reshape(tiles, _SUBLANES, _LANES), axis=0)

    if valid_rows_last == block_rows:
        # Rows divide evenly into blocks: no masking anywhere (hot path).
        o_ref[...] += fold(contrib)
    else:
        @pl.when(i != last)
        def _full_block():
            o_ref[...] += fold(contrib)

        @pl.when(i == last)
        def _ragged_block():
            # Only the final ragged block pays for the row mask; rows past
            # the array bound hold unspecified pipeline-pad data and are
            # select-masked to zero (NaN/Inf in the dead branch is harmless).
            row = jax.lax.broadcasted_iota(jnp.int32, (block_rows, _LANES), 0)
            o_ref[...] += fold(jnp.where(row < valid_rows_last, contrib, 0.0))


# ----------------------------------------------------------------------------
# Host-side runner: sum(elem_fn(a, b)) over all elements
# ----------------------------------------------------------------------------
def _partial_sum(elem_fn, a, b, *, flops_per_elem=3, transcendentals_per_elem=0):
    flat_a = jnp.ravel(a)
    flat_b = jnp.ravel(b)
    n = flat_a.shape[0]
    if flat_b.shape[0] != n:
        raise ValueError("inputs must have the same number of elements")

    def jax_sum(u, v):
        return jnp.sum(elem_fn(u.astype(jnp.float32), v.astype(jnp.float32)))

    if n < _MIN_PALLAS_ELEMS:
        return jax_sum(flat_a, flat_b), n

    rows = n // _LANES
    n_bulk = rows * _LANES
    tail = n - n_bulk                              # < 128 elements, plain JAX

    # Free reshape when n is a multiple of 128 (the common case); only a
    # prefix slice (no pad copy, no pad bytes) otherwise.
    a_bulk = (flat_a if tail == 0 else flat_a[:n_bulk]).reshape(rows, _LANES)
    b_bulk = (flat_b if tail == 0 else flat_b[:n_bulk]).reshape(rows, _LANES)

    # Multiple of 8 sublanes, never larger than the array (no block > array).
    block_rows = min(_MAX_BLOCK_ROWS, (rows // _SUBLANES) * _SUBLANES)
    num_blocks = (rows + block_rows - 1) // block_rows
    valid_rows_last = rows - (num_blocks - 1) * block_rows

    kernel = functools.partial(_reduce_sum_kernel, elem_fn=elem_fn,
                               block_rows=block_rows,
                               valid_rows_last=valid_rows_last)

    bytes_in = n_bulk * (a_bulk.dtype.itemsize + b_bulk.dtype.itemsize)
    cost = pl.CostEstimate(
        flops=flops_per_elem * n_bulk,
        transcendentals=transcendentals_per_elem * n_bulk,
        bytes_accessed=bytes_in + _SUBLANES * _LANES * 4)

    partial = pl.pallas_call(
        kernel,
        out_shape=jax.ShapeDtypeStruct((_SUBLANES, _LANES), jnp.float32),
        grid_spec=pltpu.PrefetchScalarGridSpec(
            num_scalar_prefetch=0,
            grid=(num_blocks,),
            in_specs=[
                pl.BlockSpec((block_rows, _LANES), lambda i: (i, 0)),
                pl.BlockSpec((block_rows, _LANES), lambda i: (i, 0)),
            ],
            out_specs=pl.BlockSpec((_SUBLANES, _LANES), lambda i: (0, 0)),
        ),
        compiler_params=pltpu.CompilerParams(
            dimension_semantics=("arbitrary",)),
        cost_estimate=cost,
    )(a_bulk, b_bulk)

    total = jnp.sum(partial)
    if tail:
        total = total + jax_sum(flat_a[n_bulk:], flat_b[n_bulk:])
    return total, n


# ----------------------------------------------------------------------------
# PSNRLoss forward
# ----------------------------------------------------------------------------
def psnr_loss(noisy_signal, true_signal, noisy_label=None, true_label=None,
              *, inverse=False, hard_labels=False):
    # --- signal PSNR: mse = mean(((x - y)/255)^2); 20*log10(1/mse) ----------
    # (the PyTorch forward hard-codes /255.0; the 1/255^2 is folded into the
    #  final scalar math instead of being applied per element in the kernel)
    sq_sum, n = _partial_sum(_sq_diff_elem, noisy_signal, true_signal,
                             flops_per_elem=3)
    mse = sq_sum / (jnp.float32(n) * jnp.float32(255.0 * 255.0))
    signal_psnr = jnp.where(mse == 0.0, jnp.float32(100.0),
                            20.0 * jnp.log10(1.0 / mse))

    # --- label PSNR (BCE, mean reduction) ------------------------------------
    if noisy_label is None and true_label is None:
        label_psnr = jnp.float32(100.0)   # bce_loss == 0 branch of reference
    elif noisy_label is not None and true_label is not None:
        elem = _bce_hard_elem if hard_labels else _bce_elem
        bce_sum, m = _partial_sum(
            elem, noisy_label, true_label, flops_per_elem=6,
            transcendentals_per_elem=1 if hard_labels else 2)
        bce = bce_sum / jnp.float32(m)
        label_psnr = jnp.where(bce == 0.0, jnp.float32(100.0),
                               20.0 * jnp.log10(1.0 / bce))
    else:
        raise ValueError(
            "noisy_label and true_label must be both provided or both None")

    psnr = (signal_psnr + label_psnr).astype(jnp.float32)
    if inverse:
        psnr = -psnr
    return psnr


# ----------------------------------------------------------------------------
# Pure-JAX reference (mirrors the PyTorch forward) for a sanity check
# ----------------------------------------------------------------------------
def _psnr_ref(noisy_signal, true_signal, noisy_label=None, true_label=None,
              inverse=False):
    x = jnp.ravel(noisy_signal).astype(jnp.float32) / 255.0
    y = jnp.ravel(true_signal).astype(jnp.float32) / 255.0
    mse = jnp.mean((x - y) ** 2)
    sig = jnp.where(mse == 0.0, 100.0, 20.0 * jnp.log10(1.0 / mse))
    if noisy_label is None:
        lab = jnp.float32(100.0)
    else:
        p = jnp.ravel(noisy_label).astype(jnp.float32)
        t = jnp.ravel(true_label).astype(jnp.float32)
        lp = jnp.maximum(jnp.log(p), -100.0)
        l1p = jnp.maximum(jnp.log(1.0 - p), -100.0)
        bce = jnp.mean(-(t * lp + (1.0 - t) * l1p))
        lab = jnp.where(bce == 0.0, 100.0, 20.0 * jnp.log10(1.0 / bce))
    out = sig + lab
    return -out if inverse else out


# ----------------------------------------------------------------------------
# Demo
# ----------------------------------------------------------------------------
if __name__ == "__main__":
    key = jax.random.PRNGKey(0)
    ks = jax.random.split(key, 8)

    # signals in [0, 255], NCHW-flavored shape (2048 elements: Pallas path)
    noisy_signal = jax.random.uniform(ks[0], (2, 4, 16, 16), jnp.float32) * 255.0
    true_signal = jax.random.uniform(ks[1], (2, 4, 16, 16), jnp.float32) * 255.0

    # ragged-size signals (1155 elements): exercises the masked ragged last
    # block and the <128-element plain-JAX tail
    noisy_ragged = jax.random.uniform(ks[2], (3, 5, 7, 11), jnp.float32) * 255.0
    true_ragged = jax.random.uniform(ks[3], (3, 5, 7, 11), jnp.float32) * 255.0

    # tiny labels -> plain-JAX BCE fallback path
    noisy_label = jax.random.uniform(ks[4], (2, 8), jnp.float32,
                                     minval=0.01, maxval=0.99)
    true_label = (jax.random.uniform(ks[5], (2, 8)) > 0.5).astype(jnp.float32)

    # larger labels -> Pallas BCE kernel path (both soft- and hard-target kernels)
    big_noisy_label = jax.random.uniform(ks[6], (8, 32, 128), jnp.float32,
                                         minval=0.01, maxval=0.99)
    big_true_label = (jax.random.uniform(ks[7], (8, 32, 128)) > 0.5
                      ).astype(jnp.float32)

    cases = [
        (noisy_signal, true_signal, dict()),
        (noisy_signal, true_signal,
         dict(noisy_label=noisy_label, true_label=true_label)),
        (noisy_signal, true_signal,
         dict(noisy_label=big_noisy_label, true_label=big_true_label)),
        (noisy_signal, true_signal,
         dict(noisy_label=big_noisy_label, true_label=big_true_label,
              hard_labels=True)),
        (noisy_ragged, true_ragged,
         dict(noisy_label=noisy_label, true_label=true_label, inverse=True)),
    ]

    outs = []
    for ns, ts, kwargs in cases:
        got = psnr_loss(ns, ts, **kwargs)
        ref_kwargs = {k: v for k, v in kwargs.items() if k != "hard_labels"}
        ref = _psnr_ref(ns, ts, **ref_kwargs)
        got, ref = jax.block_until_ready((got, ref))
        assert abs(float(got) - float(ref)) < 5e-2, (kwargs, float(got),
                                                     float(ref))
        outs.append(got)

    jax.block_until_ready(outs)
    print("KERNEL_OK")
</pallas_src>

<mosaic_0001>
module attributes {stable_mosaic.version = 11 : i64} {
  func.func @_reduce_sum_kernel(%arg0: i32, %arg1: memref<16x128xf32, #tpu.memory_space<vmem>>, %arg2: memref<16x128xf32, #tpu.memory_space<vmem>>, %arg3: memref<8x128xf32, #tpu.memory_space<vmem>>) attributes {dimension_semantics = [#tpu.dimension_semantics<arbitrary>], iteration_bounds = array<i64: 1>, scalar_prefetch = 0 : i64, scratch_operands = 0 : i64, tpu.core_type = #tpu.core_type<tc>, window_params = [{transform_indices = @transform_0, window_bounds = array<i64: 16, 128>}, {transform_indices = @transform_1, window_bounds = array<i64: 16, 128>}, {pipeline_mode = #tpu.pipeline_mode<synchronous>, transform_indices = @transform_2, window_bounds = array<i64: 8, 128>}]} {
    %c0_i32 = arith.constant 0 : i32
    %0 = arith.cmpi eq, %arg0, %c0_i32 : i32
    %1 = arith.extui %0 : i1 to i32
    %c0_i32_0 = arith.constant 0 : i32
    %2 = arith.cmpi ne, %1, %c0_i32_0 : i32
    scf.if %2 {
      %cst_8 = arith.constant 0.000000e+00 : f32
      %12 = vector.broadcast %cst_8 : f32 to vector<8x128xf32>
      %c0_9 = arith.constant 0 : index
      %c0_10 = arith.constant 0 : index
      %13 = vector.load %arg3[%c0_9, %c0_10] : memref<8x128xf32, #tpu.memory_space<vmem>>, vector<8x128xf32>
      tpu.vector_store %arg3[%c0_9, %c0_10], %12 {strides = array<i32>} : memref<8x128xf32, #tpu.memory_space<vmem>>, vector<8x128xf32>,
    } else {
    }
    %c0 = arith.constant 0 : index
    %c0_1 = arith.constant 0 : index
    %3 = vector.load %arg1[%c0, %c0_1] : memref<16x128xf32, #tpu.memory_space<vmem>>, vector<16x128xf32>
    %c0_2 = arith.constant 0 : index
    %c0_3 = arith.constant 0 : index
    %4 = vector.load %arg2[%c0_2, %c0_3] : memref<16x128xf32, #tpu.memory_space<vmem>>, vector<16x128xf32>
    %5 = arith.subf %3, %4 : vector<16x128xf32>
    %6 = arith.mulf %5, %5 : vector<16x128xf32>
    %c0_4 = arith.constant 0 : index
    %c0_5 = arith.constant 0 : index
    %7 = vector.load %arg3[%c0_4, %c0_5] : memref<8x128xf32, #tpu.memory_space<vmem>>, vector<8x128xf32>
    %8 = vector.shape_cast %6 : vector<16x128xf32> to vector<2x8x128xf32>
    %cst = arith.constant dense<0.000000e+00> : vector<8x128xf32>
    %9 = vector.multi_reduction <add>, %8, %cst [0] : vector<2x8x128xf32> to vector<8x128xf32>
    %10 = arith.addf %7, %9 : vector<8x128xf32>
    %c0_6 = arith.constant 0 : index
    %c0_7 = arith.constant 0 : index
    %11 = vector.load %arg3[%c0_6, %c0_7] : memref<8x128xf32, #tpu.memory_space<vmem>>, vector<8x128xf32>
    tpu.vector_store %arg3[%c0_6, %c0_7], %10 {strides = array<i32>} : memref<8x128xf32, #tpu.memory_space<vmem>>, vector<8x128xf32>,
    return
  }
  func.func @transform_0(%arg0: i32) -> (i32, i32) {
    %c0_i32 = arith.constant 0 : i32
    %c0_i32_0 = arith.constant 0 : i32
    return %arg0, %c0_i32 : i32, i32
  }
  func.func @transform_1(%arg0: i32) -> (i32, i32) {
    %c0_i32 = arith.constant 0 : i32
    %c0_i32_0 = arith.constant 0 : i32
    return %arg0, %c0_i32 : i32, i32
  }
  func.func @transform_2(%arg0: i32) -> (i32, i32) {
    %c0_i32 = arith.constant 0 : i32
    %c0_i32_0 = arith.constant 0 : i32
    %c0_i32_1 = arith.constant 0 : i32
    return %c0_i32, %c0_i32_0 : i32, i32
  }
}

</mosaic_0001>

<llo_original>
// kernel: tpu_custom_call.1
$region0: #{tpu_custom_call.1}
  #allocation0 [shape = 'u32[]', space=smem, size = 0x4, offset = 0x4, fixed_abs, tag = 'smem constant byte address 0x4 - core index']
  #allocation1 [shape = 'u32[144,128]{1,0:T(1,128)}', space=vmem, size = 0x12000, scoped, tag = 'internal scratch']
  %s0 = inlined_call_operand.hbm [shape: f32[16,128], index: 0, kind: input, shape index: {}]
  %s1 = inlined_call_operand.hbm [shape: f32[16,128], index: 1, kind: input, shape index: {}]
  %s2 = inlined_call_operand.hbm [shape: f32[8,128], index: 2, kind: output, shape index: {}]
  %s3 = sld [smem:[#allocation0]]
  $region30: #{tpu_custom_call.1} parent=0
    _
  %s5 = ssub.s32 1, %s3
  %s6 = scalar_select 0, %s5, %s3
  $region1: #{tpu_custom_call.1} parent=0
    #allocation2 [shape = 'u8[8192]{0}', space=vmem, size = 0x2000, scoped, tag = 'input window, operand 0, single buffered']
    #allocation3 [shape = 's32[1]{0}', space=sflag, size = 0x4, scoped, tag = 'scoped memory for tpu_custom_call.1']
    #allocation4 [shape = 's32[1]{0}', space=sflag, size = 0x4, scoped, tag = 'scoped memory for tpu_custom_call.1']
    #allocation5 [shape = 'u8[8192]{0}', space=vmem, size = 0x2000, scoped, tag = 'input window, operand 1, single buffered']
    #allocation6 [shape = 's32[1]{0}', space=sflag, size = 0x4, scoped, tag = 'scoped memory for tpu_custom_call.1']
    #allocation7 [shape = 'u8[4096]{0}', space=vmem, size = 0x1000, scoped, tag = 'output window, operand 0, single buffered']
    %7 = vsyncpa [#allocation3], 0
    %8 = vsyncpa [#allocation6], 0
    %9 = vsyncpa [#allocation4], 0
    // Predicated region
    $region2: #{tpu_custom_call.1} parent=1 // pred_check
      _
    $region3: #{tpu_custom_call.1} parent=1 // pred_check_branch
      %11 = sbr.rel (0) target = $region5
    $region4: #{tpu_custom_call.1} parent=1 // pred_region
      %s13 = ssub.s32 256, 256
      %14 = vsyncadd [#allocation3], %s13
      %s15 = sshll.u32 [#allocation2], 4
      %s16 = int_to_ptr.vmem [resolvable:$true] %s15
      %21 = dma.hbm_to_vmem [thread:$0]  %s0, 256, %s16, [#allocation3], 128, 128, 8
    $region5: #{tpu_custom_call.1} parent=1 // pred_fallthru
      _
    // Predicated region
    $region6: #{tpu_custom_call.1} parent=1 // pred_check
      _
    $region7: #{tpu_custom_call.1} parent=1 // pred_check_branch
      %23 = sbr.rel (0) target = $region9
    $region8: #{tpu_custom_call.1} parent=1 // pred_region
      %s25 = ssub.s32 256, 256
      %26 = vsyncadd [#allocation6], %s25
      %s27 = sshll.u32 [#allocation5], 4
      %s28 = int_to_ptr.vmem [resolvable:$true] %s27
      %33 = dma.hbm_to_vmem [thread:$0]  %s1, 256, %s28, [#allocation6], 128, 128, 8
    $region9: #{tpu_custom_call.1} parent=1 // pred_fallthru
      _
    // Predicated region
    $region10: #{tpu_custom_call.1} parent=1 // pred_check
      _
    $region11: #{tpu_custom_call.1} parent=1 // pred_check_branch
      %35 = sbr.rel (0) target = $region13
    $region12: #{tpu_custom_call.1} parent=1 // pred_region
      %36 = dma.done [#allocation3], 256
    $region13: #{tpu_custom_call.1} parent=1 // pred_fallthru
      _
    // Predicated region
    $region14: #{tpu_custom_call.1} parent=1 // pred_check
      _
    $region15: #{tpu_custom_call.1} parent=1 // pred_check_branch
      %38 = sbr.rel (0) target = $region17
    $region16: #{tpu_custom_call.1} parent=1 // pred_region
      %39 = dma.done [#allocation6], 256
    $region17: #{tpu_custom_call.1} parent=1 // pred_fallthru
      _
    %p40 = scmp.eq.s32.totalorder 0, 0
    // Predicated region
    $region18: #{tpu_custom_call.1} parent=1 // pred_check
      %p41 = pneg %p40
    $region19: #{tpu_custom_call.1} parent=1 // pred_check_branch
      %43 = sbr.rel (%p41) target = $region21
    $region20: #{tpu_custom_call.1} parent=1 // pred_region
      %44 = vst [vmem:[#allocation7] sm:$0xff] 0.0
    $region21: #{tpu_custom_call.1} parent=1 // pred_fallthru
      _
    %v45 = vld [vmem:[#allocation2] sm:$0xff]
    %v46 = vld [vmem:[#allocation2 + $0x8] sm:$0xff]
    %v47 = vld [vmem:[#allocation5] sm:$0xff]
    %v48 = vld [vmem:[#allocation5 + $0x8] sm:$0xff]
    %v49 = vsub.f32 %v45, %v47
    %v50 = vsub.f32 %v46, %v48
    %v51 = vmul.f32 %v49, %v49
    %v52 = vmul.f32 %v50, %v50
    %v53 = vld [vmem:[#allocation7] sm:$0xff]
    %v54 = vadd.f32 %v51, %v52
    %v55 = vadd.f32 %v53, %v54
    %56 = vst [vmem:[#allocation7] sm:$0xff] %v55
    // Predicated region
    $region22: #{tpu_custom_call.1} parent=1 // pred_check
      _
    $region23: #{tpu_custom_call.1} parent=1 // pred_check_branch
      %58 = sbr.rel (0) target = $region25
    $region24: #{tpu_custom_call.1} parent=1 // pred_region
      %s60 = ssub.s32 128, 128
      %61 = vsyncadd [#allocation4], %s60
      %s63 = sshll.u32 [#allocation7], 4
      %s64 = int_to_ptr.vmem [resolvable:$true] %s63
      %66 = dma.vmem_to_hbm [thread:$0]  %s64, 128, %s2, [#allocation4]
    $region25: #{tpu_custom_call.1} parent=1 // pred_fallthru
      _
    // Predicated region
    $region26: #{tpu_custom_call.1} parent=1 // pred_check
      _
    $region27: #{tpu_custom_call.1} parent=1 // pred_check_branch
      %68 = sbr.rel (0) target = $region29
    $region28: #{tpu_custom_call.1} parent=1 // pred_region
      %69 = dma.done [#allocation4], 128
    $region29: #{tpu_custom_call.1} parent=1 // pred_fallthru
      _
    %70 = vsyncpa [#allocation3], 1
    %71 = vsyncpa [#allocation6], 1
    %72 = vsyncpa [#allocation4], 1

</llo_original>
